<compile_context>
chip_gen: v7x
topology: tpu7x:2x2x1
jax: 0.10.0
libtpu: 0.0.40
codegen_flags: <defaults>
</compile_context>

<pallas_src>
import functools
import math

import jax
import jax.numpy as jnp
from jax.experimental import pallas as pl
from jax.experimental.pallas import tpu as pltpu


def _round_up(x: int, m: int) -> int:
    return ((x + m - 1) // m) * m


def _gather_kernel(rows_ref, x_hbm, o_ref, buf, sem, *, block_rows):
    """Gather `block_rows` rows of x_hbm into one output tile.

    rows_ref : SMEM int32[(padded_total,)]  flattened source-row table (prefetched)
    x_hbm    : HBM (outer*gather_dim, inner) input slab (memory_space=ANY)
    o_ref    : VMEM (block_rows, inner)      output tile
    buf      : VMEM (block_rows, inner)      gather landing buffer
    sem      : DMA semaphore shared by all row copies of this step
    """
    base = pl.program_id(0) * block_rows

    # Issue all row DMAs first so they are all in flight simultaneously.
    @pl.loop(0, block_rows)
    def _issue(j):
        src = rows_ref[base + j]
        pltpu.make_async_copy(x_hbm.at[src], buf.at[j], sem).start()

    # Drain them (each wait consumes exactly one row's worth of the semaphore).
    @pl.loop(0, block_rows)
    def _wait(j):
        pltpu.make_async_copy(x_hbm.at[0], buf.at[j], sem).wait()

    # Single big sublane-full, lane-dense store of the gathered tile.
    o_ref[...] = buf[...]


def onnx_gather(x: jax.Array, indices: jax.Array, axis: int = 0) -> jax.Array:
    """Equivalent of OnnxGather.forward / numpy.take(x, indices, axis=axis)."""
    ndim = x.ndim
    axis = axis + ndim if axis < 0 else axis
    in_shape = x.shape
    gather_dim = in_shape[axis]

    outer = math.prod(in_shape[:axis])
    inner = math.prod(in_shape[axis + 1:])

    idx_shape = indices.shape
    num_idx = math.prod(idx_shape)
    out_shape = in_shape[:axis] + idx_shape + in_shape[axis + 1:]

    idx = indices.reshape(-1).astype(jnp.int32)
    # ONNX / PyTorch allow negative indices; out-of-range is UB -> clamp to be safe.
    idx = jnp.where(idx < 0, idx + gather_dim, idx)

    # Degenerate sizes (nothing to DMA): plain XLA path.
    if num_idx == 0 or inner == 0 or outer == 0 or gather_dim == 0:
        return jnp.take(x, idx.reshape(idx_shape), axis=axis)

    idx = jnp.clip(idx, 0, gather_dim - 1)

    total = outer * num_idx
    row_bytes = inner * x.dtype.itemsize

    # Batch G gathered rows per grid step: target ~512 KiB of payload per step,
    # >=8 rows (sublane-full tiles), <=512 rows (keeps scratch well under the
    # 32 MiB scoped VMEM default on every generation, incl. v7x's 64 MiB VMEM).
    target_bytes = 512 * 1024
    g = max(1, target_bytes // max(1, row_bytes))
    g = max(8, min(512, _round_up(g, 8)))
    padded_total = _round_up(total, 8)
    g = min(g, padded_total)
    padded_total = _round_up(padded_total, g)
    grid = padded_total // g

    # Flattened source-row table (outer-major, index-minor), zero-padded so the
    # tail block still issues valid DMAs (padded output rows are sliced off).
    rows = (jnp.arange(outer, dtype=jnp.int32)[:, None] * gather_dim
            + idx[None, :]).reshape(-1)
    if padded_total != total:
        rows = jnp.concatenate(
            [rows, jnp.zeros((padded_total - total,), jnp.int32)])

    x2d = x.reshape(outer * gather_dim, inner)

    out2d = pl.pallas_call(
        functools.partial(_gather_kernel, block_rows=g),
        out_shape=jax.ShapeDtypeStruct((padded_total, inner), x.dtype),
        grid_spec=pltpu.PrefetchScalarGridSpec(
            num_scalar_prefetch=1,
            grid=(grid,),
            in_specs=[pl.BlockSpec(memory_space=pl.ANY)],  # raw HBM slab
            out_specs=pl.BlockSpec((g, inner), lambda s, rows_ref: (s, 0)),
            scratch_shapes=[
                pltpu.VMEM((g, inner), x.dtype),
                pltpu.SemaphoreType.DMA(()),
            ],
        ),
        compiler_params=pltpu.CompilerParams(
            dimension_semantics=("parallel",)),
    )(rows, x2d)

    if padded_total != total:
        out2d = out2d[:total]
    return out2d.reshape(out_shape)
    # TODO(synk): when inner < 128 (e.g. gather along the last axis) the output
    # store is lane-masked; a lane-repacked layout (indices on lanes) would be
    # needed for full store efficiency in that regime.


if __name__ == "__main__":
    key = jax.random.PRNGKey(0)
    k1, _ = jax.random.split(key)

    # Small NCHW-like input: batch=2, channels=4, H=16, W=32.
    x = jax.random.normal(k1, (2, 4, 16, 32), dtype=jnp.float32)

    # 1) gather along axis=1 (channels) with 2-D indices (incl. a negative idx).
    indices = jnp.array([[3, 1], [0, -2]], dtype=jnp.int32)
    out = jax.block_until_ready(onnx_gather(x, indices, axis=1))
    ref = jnp.take(x, jnp.where(indices < 0, indices + x.shape[1], indices),
                   axis=1)
    assert out.shape == ref.shape, (out.shape, ref.shape)
    assert jnp.array_equal(out, ref), "mismatch vs reference gather (axis=1)"

    # 2) axis=0 with 1-D indices.
    idx0 = jnp.array([1, 0, 1], dtype=jnp.int32)
    out0 = jax.block_until_ready(onnx_gather(x, idx0, axis=0))
    assert jnp.array_equal(out0, jnp.take(x, idx0, axis=0)), "mismatch (axis=0)"

    # 3) scalar (0-d) index on axis=2 — the gathered axis is removed.
    idx_s = jnp.array(2, dtype=jnp.int32)
    out_s = jax.block_until_ready(onnx_gather(x, idx_s, axis=2))
    assert jnp.array_equal(out_s, jnp.take(x, 2, axis=2)), "mismatch (scalar idx)"

    print("KERNEL_OK")
</pallas_src>

<mosaic_0001>
module attributes {stable_mosaic.version = 11 : i64} {
  func.func @_gather_kernel(%arg0: i32, %arg1: memref<8xi32, #tpu.memory_space<smem>>, %arg2: memref<8x512xf32, #tpu.memory_space<any>>, %arg3: memref<8x512xf32, #tpu.memory_space<vmem>>, %arg4: memref<8x512xf32, #tpu.memory_space<vmem>>, %arg5: memref<!tpu.dma_semaphore, #tpu.memory_space<semaphore_mem>>) attributes {dimension_semantics = [#tpu.dimension_semantics<parallel>], iteration_bounds = array<i64: 1>, scalar_prefetch = 1 : i64, scratch_operands = 2 : i64, tpu.core_type = #tpu.core_type<tc>, window_params = [{}, {transform_indices = @transform_1, window_bounds = array<i64: 8, 512>}]} {
    %c8_i32 = arith.constant 8 : i32
    %0 = arith.muli %arg0, %c8_i32 : i32
    %c0_i32 = arith.constant 0 : i32
    %c8_i32_0 = arith.constant 8 : i32
    %1 = arith.addi %c0_i32, %c8_i32_0 : i32
    %c1_i32 = arith.constant 1 : i32
    scf.for %arg6 = %c0_i32 to %1 step %c1_i32  : i32 {
      %c1_i32_9 = arith.constant 1 : i32
      %5 = arith.muli %arg6, %c1_i32_9 : i32
      %c0_i32_10 = arith.constant 0 : i32
      %6 = arith.addi %c0_i32_10, %5 : i32
      %7 = arith.addi %0, %6 : i32
      %8 = arith.index_cast %7 : i32 to index
      %9 = memref.load %arg1[%8] : memref<8xi32, #tpu.memory_space<smem>>
      %c0_i32_11 = arith.constant 0 : i32
      %10 = tpu.memref_slice %arg2[%9, %c0_i32_11] : memref<8x512xf32, #tpu.memory_space<any>> -> memref<1x512xf32, #tpu.memory_space<any>>
      %11 = tpu.memref_squeeze %10 : memref<1x512xf32, #tpu.memory_space<any>> -> memref<512xf32, #tpu.memory_space<any>>
      %c0_i32_12 = arith.constant 0 : i32
      %12 = tpu.memref_slice %arg4[%6, %c0_i32_12] : memref<8x512xf32, #tpu.memory_space<vmem>> -> memref<1x512xf32, #tpu.memory_space<vmem>>
      %13 = tpu.memref_squeeze %12 : memref<1x512xf32, #tpu.memory_space<vmem>> -> memref<512xf32, #tpu.memory_space<vmem>>
      tpu.enqueue_dma source(%11 : memref<512xf32, #tpu.memory_space<any>>) target(%13 : memref<512xf32, #tpu.memory_space<vmem>>) target_semaphore(%arg5 : memref<!tpu.dma_semaphore, #tpu.memory_space<semaphore_mem>>)
    }
    %c8_i32_1 = arith.constant 8 : i32
    %c0_i32_2 = arith.constant 0 : i32
    %c8_i32_3 = arith.constant 8 : i32
    %2 = arith.addi %c0_i32_2, %c8_i32_3 : i32
    %c1_i32_4 = arith.constant 1 : i32
    scf.for %arg6 = %c0_i32_2 to %2 step %c1_i32_4  : i32 {
      %c1_i32_9 = arith.constant 1 : i32
      %5 = arith.muli %arg6, %c1_i32_9 : i32
      %c0_i32_10 = arith.constant 0 : i32
      %6 = arith.addi %c0_i32_10, %5 : i32
      %c0_i32_11 = arith.constant 0 : i32
      %c0_i32_12 = arith.constant 0 : i32
      %7 = tpu.memref_slice %arg2[%c0_i32_11, %c0_i32_12] : memref<8x512xf32, #tpu.memory_space<any>> -> memref<1x512xf32, #tpu.memory_space<any>>
      %8 = tpu.memref_squeeze %7 : memref<1x512xf32, #tpu.memory_space<any>> -> memref<512xf32, #tpu.memory_space<any>>
      %c0_i32_13 = arith.constant 0 : i32
      %9 = tpu.memref_slice %arg4[%6, %c0_i32_13] : memref<8x512xf32, #tpu.memory_space<vmem>> -> memref<1x512xf32, #tpu.memory_space<vmem>>
      %10 = tpu.memref_squeeze %9 : memref<1x512xf32, #tpu.memory_space<vmem>> -> memref<512xf32, #tpu.memory_space<vmem>>
      tpu.wait_dma2 semaphore(%arg5 : memref<!tpu.dma_semaphore, #tpu.memory_space<semaphore_mem>>) src(%8 : memref<512xf32, #tpu.memory_space<any>>) dst(%10 : memref<512xf32, #tpu.memory_space<vmem>>)
    }
    %c8_i32_5 = arith.constant 8 : i32
    %c0 = arith.constant 0 : index
    %c0_6 = arith.constant 0 : index
    %3 = vector.load %arg4[%c0, %c0_6] : memref<8x512xf32, #tpu.memory_space<vmem>>, vector<8x512xf32>
    %c0_7 = arith.constant 0 : index
    %c0_8 = arith.constant 0 : index
    %4 = vector.load %arg3[%c0_7, %c0_8] : memref<8x512xf32, #tpu.memory_space<vmem>>, vector<8x512xf32>
    tpu.vector_store %arg3[%c0_7, %c0_8], %3 {strides = array<i32>} : memref<8x512xf32, #tpu.memory_space<vmem>>, vector<8x512xf32>,
    return
  }
  func.func @transform_1(%arg0: i32, %arg1: memref<8xi32, #tpu.memory_space<smem>>) -> (i32, i32) {
    %c0_i32 = arith.constant 0 : i32
    %c0_i32_0 = arith.constant 0 : i32
    return %arg0, %c0_i32 : i32, i32
  }
}

</mosaic_0001>

<llo_original>
// kernel: tpu_custom_call.1
$region0: #{tpu_custom_call.1}
  #allocation0 [shape = 'u32[]', space=smem, size = 0x4, offset = 0x4, fixed_abs, tag = 'smem constant byte address 0x4 - core index']
  #allocation1 [shape = 'u32[144,128]{1,0:T(1,128)}', space=vmem, size = 0x12000, scoped, tag = 'internal scratch']
  #allocation2 [shape = 'f32[8,512]{1,0:T(8,128)}', space=vmem, size = 0x4000, scoped, tag = 'scratch operand']
  #allocation3 [shape = 's32[1]{0}', space=sflag, size = 0x4, scoped, tag = 'scratch operand']
  #allocation4 [shape = 's32[1]{0}', space=sflag, size = 0x4, scoped, tag = 'scoped memory for tpu_custom_call.1']
  #allocation5 [shape = 'u8[512]{0}', space=smem, size = 0x200, scoped, tag = 'prefetched SMEM operand 0']
  #allocation8 [shape = 's32[]', space=sflag, size = 0x4, offset = 0, fixed_abs, tag = 'sflag constant byte address 0x0 - dummy sync flag']
  %s0 = inlined_call_operand.hbm [shape: s32[8], index: 0, kind: input, shape index: {}]
  %s1 = inlined_call_operand.hbm [shape: f32[8,512], index: 1, kind: input, shape index: {}]
  %s2 = inlined_call_operand.hbm [shape: f32[8,512], index: 2, kind: output, shape index: {}]
  %s3 = sld [smem:[#allocation0]]
  $region24: #{tpu_custom_call.1} parent=0
    _
  %s5 = ssub.s32 1, %s3
  %s6 = scalar_select 0, %s5, %s3
  %8 = dma.hbm_to_smem %s0, 16, [#allocation5], [#allocation4]
  %9 = dma.done [#allocation4], 16
  %10 = sfence
  $region1: #{tpu_custom_call.1} parent=0
    #allocation6 [shape = 'u8[16384]{0}', space=vmem, size = 0x4000, scoped, tag = 'output window, operand 0, single buffered']
    #allocation7 [shape = 's32[1]{0}', space=sflag, size = 0x4, scoped, tag = 'scoped memory for tpu_custom_call.1']
    %11 = vsyncpa [#allocation7], 0
    %s12 = smul.u32 0, 8
    loop: start=0, step=1, limit=8
    $region2: #{tpu_custom_call.1} parent=1 // loop_pre_header
      _
    $region3: #{tpu_custom_call.1} parent=1 // loop_header
      %s14 = sphi 0, %s18
      %p15 = scmp.ge.s32.totalorder %s14, 8
    $region4: #{tpu_custom_call.1} parent=1 // loop_header_branch
      %17 = sbr.rel (%p15) target = $region8
    $region5: #{tpu_custom_call.1} parent=1 // loop_body
      %s19 = sadd.s32 %s12, %s14
      %s20 = sld [smem:[#allocation5 + %s19]]
      %s21 = sshrl.u32 %s20, 3
      %s22 = sand.u32 %s20, 7
      %s23 = smul.u32 %s21, 32
      %s24 = sadd.s32 %s22, %s23
      %s25 = smul.addr %s24, 16
      %s26 = scalar_lea.hbm %s1, %s25
      %s27 = sshrl.u32 %s14, 3
      %s28 = sand.u32 %s14, 7
      %s29 = smul.u32 %s27, 32
      %s30 = sadd.s32 %s28, %s29
      %s31 = scalar_lea.vmem [#allocation2], %s30
      %s33 = sshll.u32 %s31, 4
      %s34 = int_to_ptr.vmem [resolvable:$true] %s33
      %36 = dma.hbm_to_vmem [thread:$0]  %s26, 64, %s34, [#allocation3], 128, 128, 1
    $region6: #{tpu_custom_call.1} parent=1 // loop_footer
      %s18 = sadd.s32 1, %s14
    $region7: #{tpu_custom_call.1} parent=1 // loop_footer_branch
      %13 = sbr.rel target = $region3
    $region8: #{tpu_custom_call.1} parent=1 // loop_exit
      _
    loop: start=0, step=1, limit=8
    $region9: #{tpu_custom_call.1} parent=1 // loop_pre_header
      _
    $region10: #{tpu_custom_call.1} parent=1 // loop_header
      %s38 = sphi 0, %s42
      %p39 = scmp.ge.s32.totalorder %s38, 8
    $region11: #{tpu_custom_call.1} parent=1 // loop_header_branch
      %41 = sbr.rel (%p39) target = $region15
    $region12: #{tpu_custom_call.1} parent=1 // loop_body
      %44 = dma.done [#allocation3], 64
    $region13: #{tpu_custom_call.1} parent=1 // loop_footer
      %s42 = sadd.s32 1, %s38
    $region14: #{tpu_custom_call.1} parent=1 // loop_footer_branch
      %37 = sbr.rel target = $region10
    $region15: #{tpu_custom_call.1} parent=1 // loop_exit
      _
    %v45 = vld [vmem:[#allocation2] sm:$0xff]
    %v46 = vld [vmem:[#allocation2 + $0x8] sm:$0xff]
    %v47 = vld [vmem:[#allocation2 + $0x10] sm:$0xff]
    %v48 = vld [vmem:[#allocation2 + $0x18] sm:$0xff]
    %49 = vst [vmem:[#allocation6] sm:$0xff] %v45
    %50 = vst [vmem:[#allocation6 + $0x8] sm:$0xff] %v46
    %51 = vst [vmem:[#allocation6 + $0x10] sm:$0xff] %v47
    %52 = vst [vmem:[#allocation6 + $0x18] sm:$0xff] %v48
    // Predicated region
    $region16: #{tpu_custom_call.1} parent=1 // pred_check
      _
    $region17: #{tpu_custom_call.1} parent=1 // pred_check_branch
      %54 = sbr.rel (0) target = $region19
    $region18: #{tpu_custom_call.1} parent=1 // pred_region
      %s56 = ssub.s32 512, 512
      %57 = vsyncadd [#allocation7], %s56
      %s59 = sshll.u32 [#allocation6], 4
      %s60 = int_to_ptr.vmem [resolvable:$true] %s59
      %62 = dma.vmem_to_hbm [thread:$0]  %s60, 512, %s2, [#allocation7]
    $region19: #{tpu_custom_call.1} parent=1 // pred_fallthru
      _
    // Predicated region
    $region20: #{tpu_custom_call.1} parent=1 // pred_check
      _
    $region21: #{tpu_custom_call.1} parent=1 // pred_check_branch
      %64 = sbr.rel (0) target = $region23
    $region22: #{tpu_custom_call.1} parent=1 // pred_region
      %65 = dma.done [#allocation7], 512
    $region23: #{tpu_custom_call.1} parent=1 // pred_fallthru
      _
    %66 = vsyncpa [#allocation7], 1
  %67 = vsyncmov [#allocation3]
  %s68 = vpop.sfrf %67
  %p69 = scmp.eq.s32.totalorder %s68, 0
  %p70 = pneg %p69
  %72 = shalt.err (%p70)

</llo_original>
